<compile_context>
chip_gen: v5e
topology: v5e:2x2
jax: 0.10.0
libtpu: 0.0.40
codegen_flags: <defaults>
</compile_context>

<pallas_src>
import functools

import jax
import jax.numpy as jnp
from jax.experimental import pallas as pl
from jax.experimental.pallas import tpu as pltpu


def _causal_conv1d_kernel(x_ref, w_ref, b_ref, o_ref, carry_ref, win_ref, *,
                          K, dilation, P, P_pad, TL):
    """One (batch, L-tile) grid step.

    x_ref:     (C_in, TL)           current sequence tile
    w_ref:     (C_out_p, K*C_in)    taps folded into the contraction dim
    b_ref:     (C_out_p, 1)         bias (f32)
    o_ref:     (C_out_p, TL)        output tile
    carry_ref: (C_in, P_pad)        last P_pad input samples of the previous tile
    win_ref:   (C_in, P_pad + TL)   [history | current tile] assembly buffer
    """
    j = pl.program_id(1)

    if P > 0:
        # New sequence: causal history left of t=0 is zeros.
        @pl.when(j == 0)
        def _():
            carry_ref[...] = jnp.zeros_like(carry_ref)

        # Assemble the window with lane-aligned stores only (offsets 0 and P_pad).
        win_ref[:, :P_pad] = carry_ref[...]
        win_ref[:, P_pad:] = x_ref[...]
        # History for the next L tile = last P_pad samples of this window.
        carry_ref[...] = win_ref[:, TL:TL + P_pad]

        # Stacked shifted activations: stack[k*C_in + c, t] = x[c, t + k*d - P].
        base = P_pad - P
        taps = [win_ref[:, base + k * dilation: base + k * dilation + TL]
                for k in range(K)]
    else:  # P == 0 (K == 1 or dilation == 0): no history needed.
        taps = [x_ref[...]] * K

    stack = taps[0] if K == 1 else jnp.concatenate(taps, axis=0)   # (K*C_in, TL)

    # Single MXU matmul in the operands' native dtype, f32 accumulation.
    acc = jnp.dot(w_ref[...], stack, preferred_element_type=jnp.float32)
    o_ref[...] = (acc + b_ref[...]).astype(o_ref.dtype)


def causal_conv1d(x, w, b, *, dilation, tile_l=512):
    """x: (B, C_in, L), w: (C_out, C_in, K), b: (C_out,) -> (B, C_out, L)."""
    B, C_in, L = x.shape
    C_out, C_in_w, K = w.shape
    assert C_in_w == C_in, "weight/in_channels mismatch"
    P = (K - 1) * dilation

    # L tiling: last-dim blocks must be a multiple of 128 or the full dim.
    TL = L if L <= tile_l else tile_l
    num_l_tiles = pl.cdiv(L, TL)
    # History length rounded up to a lane multiple so window stores stay aligned.
    P_pad = 128 * pl.cdiv(max(P, 1), 128)

    # Pad C_out to a full sublane group -> unmasked output stores (pads only the
    # tiny weight/bias; x itself is never copied or padded in HBM).
    sub = 16 if jnp.dtype(x.dtype).itemsize == 2 else 8
    C_out_p = sub * ((C_out + sub - 1) // sub)

    # Fold taps into the contraction dim: w2[o, k*C_in + c] = w[o, c, k].
    w2 = jnp.transpose(w, (0, 2, 1)).reshape(C_out, K * C_in)
    w2 = jnp.pad(w2, ((0, C_out_p - C_out), (0, 0))).astype(x.dtype)
    b2 = jnp.pad(b, (0, C_out_p - C_out)).reshape(C_out_p, 1).astype(jnp.float32)

    kernel = functools.partial(
        _causal_conv1d_kernel, K=K, dilation=dilation, P=P, P_pad=P_pad, TL=TL)

    out = pl.pallas_call(
        kernel,
        out_shape=jax.ShapeDtypeStruct((B, C_out_p, L), x.dtype),
        grid=(B, num_l_tiles),
        in_specs=[
            pl.BlockSpec((None, C_in, TL), lambda bb, j: (bb, 0, j)),    # x tile
            pl.BlockSpec((C_out_p, K * C_in), lambda bb, j: (0, 0)),     # weights (resident)
            pl.BlockSpec((C_out_p, 1), lambda bb, j: (0, 0)),            # bias (resident)
        ],
        out_specs=pl.BlockSpec((None, C_out_p, TL), lambda bb, j: (bb, 0, j)),
        scratch_shapes=[
            pltpu.VMEM((C_in, P_pad), x.dtype),        # causal history carry
            pltpu.VMEM((C_in, P_pad + TL), x.dtype),   # window assembly buffer
        ],
        compiler_params=pltpu.CompilerParams(
            # batch is independent (megacore-parallel); L tiles carry the causal
            # history sequentially.
            dimension_semantics=("parallel", "arbitrary")),
    )(x, w2, b2)

    return out[:, :C_out, :]


def _reference(x, w, b, dilation):
    """Exact PyTorch causal-conv semantics via lax (left pad only)."""
    K = w.shape[-1]
    P = (K - 1) * dilation
    y = jax.lax.conv_general_dilated(
        x, w, window_strides=(1,), padding=[(P, 0)], rhs_dilation=(dilation,),
        dimension_numbers=("NCH", "OIH", "NCH"))
    return y + b[None, :, None]


if __name__ == "__main__":
    key = jax.random.PRNGKey(0)

    # (B, C_in, C_out, L, K, dilation, tile_l): a tiny single-tile case matching the
    # module's toy sizes, plus a multi-tile case exercising the causal carry.
    cases = [
        (2, 4, 6, 16, 3, 2, 512),
        (2, 4, 6, 384, 3, 4, 128),
    ]
    for (B, C_in, C_out, L, K, dil, tl) in cases:
        key, kx, kw, kb = jax.random.split(key, 4)
        bound = 1.0 / jnp.sqrt(jnp.float32(C_in * K))
        x = jax.random.normal(kx, (B, C_in, L), dtype=jnp.float32)
        w = jax.random.uniform(kw, (C_out, C_in, K), minval=-bound, maxval=bound,
                               dtype=jnp.float32)
        b = jax.random.uniform(kb, (C_out,), minval=-bound, maxval=bound,
                               dtype=jnp.float32)

        out = jax.block_until_ready(causal_conv1d(x, w, b, dilation=dil, tile_l=tl))
        ref = _reference(x, w, b, dil)

        assert out.shape == (B, C_out, L)
        assert jnp.allclose(out, ref, atol=2e-5, rtol=2e-5), (
            f"mismatch vs reference conv for case {(B, C_in, C_out, L, K, dil, tl)}")

    print("KERNEL_OK")
</pallas_src>

<mosaic_0001>
module attributes {stable_mosaic.version = 11 : i64} {
  func.func @_causal_conv1d_kernel(%arg0: i32, %arg1: i32, %arg2: memref<1x4x16xf32, #tpu.memory_space<vmem>>, %arg3: memref<8x12xf32, #tpu.memory_space<vmem>>, %arg4: memref<8x1xf32, #tpu.memory_space<vmem>>, %arg5: memref<1x8x16xf32, #tpu.memory_space<vmem>>, %arg6: memref<4x128xf32, #tpu.memory_space<vmem>>, %arg7: memref<4x144xf32, #tpu.memory_space<vmem>>) attributes {dimension_semantics = [#tpu.dimension_semantics<parallel>, #tpu.dimension_semantics<arbitrary>], iteration_bounds = array<i64: 2, 1>, scalar_prefetch = 0 : i64, scratch_operands = 2 : i64, tpu.core_type = #tpu.core_type<tc>, window_params = [{transform_indices = @transform_0, window_bounds = array<i64: 1, 4, 16>}, {pipeline_mode = #tpu.pipeline_mode<synchronous>, transform_indices = @transform_1, window_bounds = array<i64: 8, 12>}, {pipeline_mode = #tpu.pipeline_mode<synchronous>, transform_indices = @transform_2, window_bounds = array<i64: 8, 1>}, {transform_indices = @transform_3, window_bounds = array<i64: 1, 8, 16>}]} {
    %c0_i32 = arith.constant 0 : i32
    %0 = arith.cmpi eq, %arg1, %c0_i32 : i32
    %1 = arith.extui %0 : i1 to i32
    %c0_i32_0 = arith.constant 0 : i32
    %2 = arith.cmpi ne, %1, %c0_i32_0 : i32
    scf.if %2 {
      %cst_22 = arith.constant 0.000000e+00 : f32
      %22 = vector.broadcast %cst_22 : f32 to vector<4x128xf32>
      %c0_23 = arith.constant 0 : index
      %c0_24 = arith.constant 0 : index
      %23 = vector.load %arg6[%c0_23, %c0_24] : memref<4x128xf32, #tpu.memory_space<vmem>>, vector<4x128xf32>
      tpu.vector_store %arg6[%c0_23, %c0_24], %22 {strides = array<i32>} : memref<4x128xf32, #tpu.memory_space<vmem>>, vector<4x128xf32>,
    } else {
    }
    %c0 = arith.constant 0 : index
    %c0_1 = arith.constant 0 : index
    %3 = vector.load %arg6[%c0, %c0_1] : memref<4x128xf32, #tpu.memory_space<vmem>>, vector<4x128xf32>
    %c0_2 = arith.constant 0 : index
    %c0_3 = arith.constant 0 : index
    %4 = vector.load %arg7[%c0_2, %c0_3] : memref<4x144xf32, #tpu.memory_space<vmem>>, vector<4x128xf32>
    tpu.vector_store %arg7[%c0_2, %c0_3], %3 {strides = array<i32>} : memref<4x144xf32, #tpu.memory_space<vmem>>, vector<4x128xf32>,
    %c0_4 = arith.constant 0 : index
    %c0_5 = arith.constant 0 : index
    %c0_6 = arith.constant 0 : index
    %5 = vector.load %arg2[%c0_4, %c0_5, %c0_6] : memref<1x4x16xf32, #tpu.memory_space<vmem>>, vector<1x4x16xf32>
    %6 = vector.shape_cast %5 : vector<1x4x16xf32> to vector<4x16xf32>
    %c0_7 = arith.constant 0 : index
    %c128 = arith.constant 128 : index
    %7 = vector.load %arg7[%c0_7, %c128] : memref<4x144xf32, #tpu.memory_space<vmem>>, vector<4x16xf32>
    tpu.vector_store %arg7[%c0_7, %c128], %6 {strides = array<i32>} : memref<4x144xf32, #tpu.memory_space<vmem>>, vector<4x16xf32>,
    %c0_8 = arith.constant 0 : index
    %c16 = arith.constant 16 : index
    %8 = vector.load %arg7[%c0_8, %c16] : memref<4x144xf32, #tpu.memory_space<vmem>>, vector<4x128xf32>
    %c0_9 = arith.constant 0 : index
    %c0_10 = arith.constant 0 : index
    %9 = vector.load %arg6[%c0_9, %c0_10] : memref<4x128xf32, #tpu.memory_space<vmem>>, vector<4x128xf32>
    tpu.vector_store %arg6[%c0_9, %c0_10], %8 {strides = array<i32>} : memref<4x128xf32, #tpu.memory_space<vmem>>, vector<4x128xf32>,
    %c0_11 = arith.constant 0 : index
    %c124 = arith.constant 124 : index
    %10 = vector.load %arg7[%c0_11, %c124] : memref<4x144xf32, #tpu.memory_space<vmem>>, vector<4x16xf32>
    %c0_12 = arith.constant 0 : index
    %c126 = arith.constant 126 : index
    %11 = vector.load %arg7[%c0_12, %c126] : memref<4x144xf32, #tpu.memory_space<vmem>>, vector<4x16xf32>
    %c0_13 = arith.constant 0 : index
    %c128_14 = arith.constant 128 : index
    %12 = vector.load %arg7[%c0_13, %c128_14] : memref<4x144xf32, #tpu.memory_space<vmem>>, vector<4x16xf32>
    %13 = tpu.concatenate %10, %11, %12 in 0 : vector<4x16xf32>, vector<4x16xf32>, vector<4x16xf32> -> vector<12x16xf32>
    %c0_15 = arith.constant 0 : index
    %c0_16 = arith.constant 0 : index
    %14 = vector.load %arg3[%c0_15, %c0_16] : memref<8x12xf32, #tpu.memory_space<vmem>>, vector<8x12xf32>
    %cst = arith.constant dense<0.000000e+00> : vector<8x16xf32>
    %15 = tpu.matmul %14, %13, %cst {dimension_numbers = #tpu.dot_dimension_numbers<[1], [0], [0], [1], [0, 0, 1, 1], [], []>} : vector<8x12xf32>, vector<12x16xf32>, vector<8x16xf32> -> vector<8x16xf32>
    %c0_17 = arith.constant 0 : index
    %c0_18 = arith.constant 0 : index
    %16 = vector.load %arg4[%c0_17, %c0_18] : memref<8x1xf32, #tpu.memory_space<vmem>>, vector<8x1xf32>
    %17 = vector.broadcast %16 : vector<8x1xf32> to vector<8x16xf32>
    %18 = arith.addf %15, %17 : vector<8x16xf32>
    %c0_19 = arith.constant 0 : index
    %c0_20 = arith.constant 0 : index
    %c0_21 = arith.constant 0 : index
    %19 = vector.load %arg5[%c0_19, %c0_20, %c0_21] : memref<1x8x16xf32, #tpu.memory_space<vmem>>, vector<1x8x16xf32>
    %20 = vector.shape_cast %19 : vector<1x8x16xf32> to vector<8x16xf32>
    %21 = vector.shape_cast %18 : vector<8x16xf32> to vector<1x8x16xf32>
    tpu.vector_store %arg5[%c0_19, %c0_20, %c0_21], %21 {strides = array<i32>} : memref<1x8x16xf32, #tpu.memory_space<vmem>>, vector<1x8x16xf32>,
    return
  }
  func.func @transform_0(%arg0: i32, %arg1: i32) -> (i32, i32, i32) {
    %c0_i32 = arith.constant 0 : i32
    %c0_i32_0 = arith.constant 0 : i32
    return %arg0, %c0_i32, %arg1 : i32, i32, i32
  }
  func.func @transform_1(%arg0: i32, %arg1: i32) -> (i32, i32) {
    %c0_i32 = arith.constant 0 : i32
    %c0_i32_0 = arith.constant 0 : i32
    %c0_i32_1 = arith.constant 0 : i32
    return %c0_i32, %c0_i32_0 : i32, i32
  }
  func.func @transform_2(%arg0: i32, %arg1: i32) -> (i32, i32) {
    %c0_i32 = arith.constant 0 : i32
    %c0_i32_0 = arith.constant 0 : i32
    %c0_i32_1 = arith.constant 0 : i32
    return %c0_i32, %c0_i32_0 : i32, i32
  }
  func.func @transform_3(%arg0: i32, %arg1: i32) -> (i32, i32, i32) {
    %c0_i32 = arith.constant 0 : i32
    %c0_i32_0 = arith.constant 0 : i32
    return %arg0, %c0_i32, %arg1 : i32, i32, i32
  }
}

</mosaic_0001>

<llo_original>
// kernel: tpu_custom_call.1
$region0: #{tpu_custom_call.1}
  #allocation0 [shape = 'u32[]', space=smem, size = 0x4, offset = 0x4, fixed_abs, tag = 'smem constant byte address 0x4 - core index']
  #allocation1 [shape = 'u32[72,128]{1,0:T(1,128)}', space=vmem, size = 0x9000, scoped, tag = 'internal scratch']
  #allocation2 [shape = 'f32[4,128]{1,0:T(4,128)}', space=vmem, size = 0x800, scoped, tag = 'scratch operand']
  #allocation3 [shape = 'f32[4,144]{1,0:T(4,128)}', space=vmem, size = 0x1000, scoped, tag = 'scratch operand']
  %s0 = inlined_call_operand.vmem [shape: f32[2,4,16], index: 0, kind: input, shape index: {}]
  %s1 = inlined_call_operand.hbm [shape: f32[8,12], index: 1, kind: input, shape index: {}]
  %s2 = inlined_call_operand.vmem [shape: f32[8,1], index: 2, kind: input, shape index: {}]
  %s3 = inlined_call_operand.hbm [shape: f32[2,8,16], index: 3, kind: output, shape index: {}]
  %s4 = sld [smem:[#allocation0]]
  $region53: #{tpu_custom_call.1} parent=0
    _
  %s6 = ssub.s32 1, %s4
  %s7 = scalar_select 0, %s6, %s4
  $region1: #{tpu_custom_call.1} parent=0
    #allocation4 [shape = 'u8[4096]{0}', space=vmem, size = 0x1000, scoped, tag = 'input window, operand 1, single buffered']
    #allocation5 [shape = 's32[2]{0}', space=sflag, size = 0x8, scoped, tag = 'scoped memory for tpu_custom_call.1']
    #allocation6 [shape = 's32[2]{0}', space=sflag, size = 0x8, scoped, tag = 'scoped memory for tpu_custom_call.1']
    #allocation7 [shape = 'u8[8192]{0}', space=vmem, size = 0x2000, scoped, tag = 'output window, operand 0']
    %8 = vsyncpa [#allocation5], 0
    %9 = vsyncpa [#allocation6], 0
    %s10 = scalar_lea.sflag [#allocation6], 1
    %11 = vsyncpa %s10, 0
    loop: start=0, step=1, limit=4
    $region2: #{tpu_custom_call.1} parent=1 // loop_pre_header
      _
    $region3: #{tpu_custom_call.1} parent=1 // loop_header
      %s13 = sphi 0, %s17
      %p14 = scmp.ge.s32.totalorder %s13, 4
      %s20 = sphi 0, %s32
      %s21 = sphi 0, %s28
      %s22 = sphi 0, %s20
      %s23 = sphi 0, %s21
      %s24 = sphi 0, %s22
      %s25 = sphi 0, %s23
      %s37 = sphi 0, %s39
      %s40 = sphi 0, %s37
      %s41 = sphi 0, %s40
      %s57 = sphi 0, %s41
      %s61 = sphi 0, %s61
      %s63 = sphi 0, %s61
      %s64 = sphi 0, %s63
      %s78 = sphi 0, %s64
      %s82 = sphi 0, %s82
      %s84 = sphi 0, %s82
      %s85 = sphi 0, %s84
      %s99 = sphi 0, %s85
      %s107 = sphi 0, %s109
      %s110 = sphi 0, %s107
      %s111 = sphi 0, %s110
      %s127 = sphi 0, %s111
    $region4: #{tpu_custom_call.1} parent=1 // loop_header_branch
      %16 = sbr.rel (%p14) target = $region8
    $region5: #{tpu_custom_call.1} parent=1 // loop_body
      %s18 = ssub.s32 %s13, 1
      %s19 = ssub.s32 %s13, 2
      %s26 = sadd.s32 1, %s21
      %p27 = scmp.ge.s32.totalorder %s26, 1
      %s28 = scalar_select %p27, 0, %s26
      %s29 = sadd.s32 1, %s20
      %s30 = scalar_select %p27, %s29, %s20
      %p31 = scmp.ge.s32.totalorder %s30, 2
      %s32 = scalar_select %p31, 0, %s30
      %s33 = ssub.s32 %s20, %s32
      %s34 = ssub.s32 %s21, %s28
      %s35 = sor.u32 %s33, %s34
      %p36 = scmp.eq.s32.totalorder %s35, 0
      %s38 = sadd.s32 %s37, 1
      %s39 = scalar_select %p36, %s37, %s38
      %p42 = pneg %p36
      %p43 = scmp.eq.s32.totalorder %s13, 1
      %p44 = por %p42, %p43
      %p45 = scmp.ne.s32.totalorder %s37, %s40
      %p46 = scmp.eq.s32.totalorder %s13, 0
      %p47 = por %p45, %p46
      %p48 = scmp.ne.s32.totalorder %s37, %s40
      %p49 = scmp.eq.s32.totalorder %s18, 1
      %p50 = por %p48, %p49
      %p51 = scmp.ne.s32.totalorder %s40, %s41
      %p52 = scmp.eq.s32.totalorder %s18, 0
      %p53 = por %p51, %p52
      %p54 = scmp.ne.s32.totalorder %s40, %s41
      %p55 = scmp.eq.s32.totalorder %s19, 1
      %p56 = por %p54, %p55
      %p58 = scmp.ne.s32.totalorder %s41, %s57
      %p59 = scmp.eq.s32.totalorder %s19, 0
      %p60 = por %p58, %p59
      %s62 = sadd.s32 %s61, 1
      %p65 = scmp.eq.s32.totalorder %s13, 1
      %p66 = scmp.ne.s32.totalorder %s61, %s63
      %p67 = scmp.eq.s32.totalorder %s13, 0
      %p68 = por %p66, %p67
      %p69 = scmp.ne.s32.totalorder %s61, %s63
      %p70 = scmp.eq.s32.totalorder %s18, 1
      %p71 = por %p69, %p70
      %p72 = scmp.ne.s32.totalorder %s63, %s64
      %p73 = scmp.eq.s32.totalorder %s18, 0
      %p74 = por %p72, %p73
      %p75 = scmp.ne.s32.totalorder %s63, %s64
      %p76 = scmp.eq.s32.totalorder %s19, 1
      %p77 = por %p75, %p76
      %p79 = scmp.ne.s32.totalorder %s64, %s78
      %p80 = scmp.eq.s32.totalorder %s19, 0
      %p81 = por %p79, %p80
      %s83 = sadd.s32 %s82, 1
      %p86 = scmp.eq.s32.totalorder %s13, 1
      %p87 = scmp.ne.s32.totalorder %s82, %s84
      %p88 = scmp.eq.s32.totalorder %s13, 0
      %p89 = por %p87, %p88
      %p90 = scmp.ne.s32.totalorder %s82, %s84
      %p91 = scmp.eq.s32.totalorder %s18, 1
      %p92 = por %p90, %p91
      %p93 = scmp.ne.s32.totalorder %s84, %s85
      %p94 = scmp.eq.s32.totalorder %s18, 0
      %p95 = por %p93, %p94
      %p96 = scmp.ne.s32.totalorder %s84, %s85
      %p97 = scmp.eq.s32.totalorder %s19, 1
      %p98 = por %p96, %p97
      %p100 = scmp.ne.s32.totalorder %s85, %s99
      %p101 = scmp.eq.s32.totalorder %s19, 0
      %p102 = por %p100, %p101
      %s103 = ssub.s32 %s20, %s32
      %s104 = ssub.s32 %s21, %s28
      %s105 = sor.u32 %s103, %s104
      %p106 = scmp.eq.s32.totalorder %s105, 0
      %s108 = sadd.s32 %s107, 1
      %s109 = scalar_select %p106, %s107, %s108
      %p112 = pneg %p106
      %p113 = scmp.eq.s32.totalorder %s13, 1
      %p114 = por %p112, %p113
      %p115 = scmp.ne.s32.totalorder %s107, %s110
      %p116 = scmp.eq.s32.totalorder %s13, 0
      %p117 = por %p115, %p116
      %p118 = scmp.ne.s32.totalorder %s107, %s110
      %p119 = scmp.eq.s32.totalorder %s18, 1
      %p120 = por %p118, %p119
      %p121 = scmp.ne.s32.totalorder %s110, %s111
      %p122 = scmp.eq.s32.totalorder %s18, 0
      %p123 = por %p121, %p122
      %p124 = scmp.ne.s32.totalorder %s110, %s111
      %p125 = scmp.eq.s32.totalorder %s19, 1
      %p126 = por %p124, %p125
      %p128 = scmp.ne.s32.totalorder %s111, %s127
      %p129 = scmp.eq.s32.totalorder %s19, 0
      %p130 = por %p128, %p129
      %p131 = scmp.le.s32.totalorder 1, %s13
      %p132 = scmp.lt.s32.totalorder %s13, 3
      %p133 = pnand %p131, %p132
      %p134 = pneg %p133
      // Predicated region
      $region9: #{tpu_custom_call.1} parent=5 // pred_check
        _
      $region10: #{tpu_custom_call.1} parent=5 // pred_check_branch
        %136 = sbr.rel (%p133) target = $region12
      $region11: #{tpu_custom_call.1} parent=5 // pred_region
        %s137 = ssub.s32 %s13, 1
        // Predicated region
        $region13: #{tpu_custom_call.1} parent=11 // pred_check
          %p138 = pneg %p74
        $region14: #{tpu_custom_call.1} parent=11 // pred_check_branch
          %140 = sbr.rel (%p138) target = $region16
        $region15: #{tpu_custom_call.1} parent=11 // pred_region
          %142 = vsyncadd [#allocation5], 0
          %s144 = sshll.u32 %s1, 4
          %s145 = int_to_ptr.hbm [resolvable:$true] %s144
          %s146 = sshll.u32 [#allocation4], 4
          %s147 = int_to_ptr.vmem [resolvable:$true] %s146
          %149 = dma.hbm_to_vmem [thread:$0]  %s145, 128, %s147, [#allocation5]
        $region16: #{tpu_custom_call.1} parent=11 // pred_fallthru
          _
        // Predicated region
        $region17: #{tpu_custom_call.1} parent=11 // pred_check
          %p150 = pneg %p95
        $region18: #{tpu_custom_call.1} parent=11 // pred_check_branch
          %152 = sbr.rel (%p150) target = $region20
        $region19: #{tpu_custom_call.1} parent=11 // pred_region
          _
        $region20: #{tpu_custom_call.1} parent=11 // pred_fallthru
          _
      $region12: #{tpu_custom_call.1} parent=5 // pred_fallthru
        _
      %p153 = scmp.lt.s32.totalorder %s13, 2
      // Predicated region
      $region21: #{tpu_custom_call.1} parent=5 // pred_check
        %p154 = pneg %p153
      $region22: #{tpu_custom_call.1} parent=5 // pred_check_branch
        %156 = sbr.rel (%p154) target = $region24
      $region23: #{tpu_custom_call.1} parent=5 // pred_region
        // Predicated region
        $region25: #{tpu_custom_call.1} parent=23 // pred_check
          %p157 = pneg %p47
        $region26: #{tpu_custom_call.1} parent=23 // pred_check_branch
          %159 = sbr.rel (%p157) target = $region28
        $region27: #{tpu_custom_call.1} parent=23 // pred_region
          %p160 = scmp.lt.s32.totalorder %s20, 1
          %s161 = scalar_select %p160, %s20, 1
          %p162 = scmp.lt.s32.totalorder %s21, 0
          %s163 = scalar_select %p162, %s21, 0
          %s164 = sadd.s32 %s163, %s161
          %s165 = smul.addr %s164, 4
          %s166 = scalar_lea.vmem %s0, %s165
        $region28: #{tpu_custom_call.1} parent=23 // pred_fallthru
          _
      $region24: #{tpu_custom_call.1} parent=5 // pred_fallthru
        _
      %p167 = scmp.le.s32.totalorder 1, %s13
      %p168 = scmp.lt.s32.totalorder %s13, 3
      %p169 = pnand %p167, %p168
      %p170 = pneg %p169
      // Predicated region
      $region29: #{tpu_custom_call.1} parent=5 // pred_check
        _
      $region30: #{tpu_custom_call.1} parent=5 // pred_check_branch
        %172 = sbr.rel (%p169) target = $region32
      $region31: #{tpu_custom_call.1} parent=5 // pred_region
        %s173 = ssub.s32 %s13, 1
        // Predicated region
        $region33: #{tpu_custom_call.1} parent=31 // pred_check
          %p174 = pneg %p74
        $region34: #{tpu_custom_call.1} parent=31 // pred_check_branch
          %176 = sbr.rel (%p174) target = $region36
        $region35: #{tpu_custom_call.1} parent=31 // pred_region
          %178 = dma.done [#allocation5], 128
        $region36: #{tpu_custom_call.1} parent=31 // pred_fallthru
          _
        %p179 = scmp.lt.s32.totalorder %s22, 1
        %s180 = scalar_select %p179, %s22, 1
        %p181 = scmp.lt.s32.totalorder %s23, 0
        %s182 = scalar_select %p181, %s23, 0
        %s183 = sadd.s32 %s182, %s180
        %s184 = smul.addr %s183, 4
        %s185 = scalar_lea.vmem %s0, %s184
        %p186 = pneg %p53
        %p187 = pneg %p50
        %p188 = pneg %p74
        %p189 = pneg %p71
        %p190 = pneg %p95
        %p191 = pneg %p92
        %p192 = pneg %p123
        %p193 = pneg %p120
        %s194 = sand.u32 %s110, 1
        %s195 = scalar_lea.sflag [#allocation6], %s194
        %s196 = sand.u32 %s110, 1
        %s197 = smul.addr %s196, 8
        %s198 = scalar_lea.vmem [#allocation7], %s197
        %p199 = scmp.lt.s32.totalorder %s22, 1
        %s200 = scalar_select %p199, %s22, 1
        %p201 = scmp.lt.s32.totalorder %s23, 0
        %s202 = scalar_select %p201, %s23, 0
        %s203 = sadd.s32 %s202, %s200
        %s204 = smul.addr %s203, 4
        %s205 = scalar_lea.vmem %s0, %s204
        %p206 = scmp.eq.s32.totalorder %s23, 0
        // Predicated region
        $region37: #{tpu_custom_call.1} parent=31 // pred_check
          %p207 = pneg %p206
        $region38: #{tpu_custom_call.1} parent=31 // pred_check_branch
          %209 = sbr.rel (%p207) target = $region40
        $region39: #{tpu_custom_call.1} parent=31 // pred_region
          %210 = vst [vmem:[#allocation2] sm:$0xf] 0.0
        $region40: #{tpu_custom_call.1} parent=31 // pred_fallthru
          _
        %v211 = vld [vmem:[#allocation2] sm:$0xf]
        %212 = vst [vmem:[#allocation3] sm:$0xf] %v211
        %v213 = vld [vmem:[%s205] sm:$0xf]
        %vm214 = vcmask 125952
        %215 = vst.msk [vmem:[#allocation3 + $0x4] sm:$0xf] %vm214, %v213
        %v216 = vld [vmem:[#allocation3] sm:$0xff]
        %218 = vst [vmem:[#allocation1] ss:$2 sm:$0xff] %v216
        %v219 = vld.sshfl [vmem:[#allocation1] sm:$0xff pattern:$0x75316420]
        %v220 = vld.sshfl [vmem:[#allocation1 + $0x8] sm:$0xff pattern:$0x75316420]
        %221 = vrot.lane.b32.xlu0 %v219, 112
        %v222 = vpop.permute.xlu0 %221
        %223 = vrot.lane.b32.xlu0 %v220, 112
        %v224 = vpop.permute.xlu0 %223
        %vm225 = vcmask 916480
        %v226 = vsel %vm225, %v222, %v224
        %228 = vst [vmem:[#allocation2] sm:$0xf] %v226
        %v229 = vld [vmem:[#allocation3] sm:$0xff]
        %v230 = vld [vmem:[#allocation3 + $0x4] sm:$0xf]
        %232 = vst [vmem:[#allocation1] ss:$2 sm:$0xff] %v229
        %v233 = vld.sshfl [vmem:[#allocation1] sm:$0xff pattern:$0x75316420]
        %v234 = vld.sshfl [vmem:[#allocation1 + $0x8] sm:$0xff pattern:$0x75316420]
        %s237 = scalar_lea.vmem [#allocation1], 1
        %238 = vst [vmem:[%s237] ss:$2 sm:$0xff] %v229
        %v239 = vld.sshfl [vmem:[#allocation1] sm:$0xff pattern:$0x75316420]
        %v240 = vld.sshfl [vmem:[#allocation1 + $0x8] sm:$0xff pattern:$0x75316420]
        %241 = vrot.lane.b32.xlu0 %v239, 126
        %v242 = vpop.permute.xlu0 %241
        %243 = vrot.lane.b32.xlu0 %v240, 126
        %v244 = vpop.permute.xlu0 %243
        %vm245 = vcmask 1031168
        %v246 = vsel %vm245, %v242, %v244
        %250 = vst [vmem:[#allocation1] ss:$2 sm:$0xff] %v230
        %v251 = vld.sshfl [vmem:[#allocation1] sm:$0xff pattern:$0x75316420]
        %252 = vrot.lane.b32.xlu0 %v251, 124
        %v253 = vpop.permute.xlu0 %252
        %vm254 = vcmask 1043456
        %v255 = vsel %vm254, %v233, %v246
        %v256 = vsel %vm254, %v234, %v244
        %v257 = vld [vmem:[#allocation4] sm:$0xff]
        %v258 = vld [vmem:[%s2] sm:$0xff]
        %260 = vset.pattern.permute.xlu0 0
        %261 = vperm.xlu0 %260, %v258
        %v262 = vpop.permute.xlu0 %261
        %266 = vrot.lane.b32.xlu0 %v255, 4
        %v267 = vpop.permute.xlu0 %266
        %268 = vrot.lane.b32.xlu0 %v256, 4
        %v269 = vpop.permute.xlu0 %268
        %270 = vrot.lane.b32.xlu0 %v253, 4
        %v271 = vpop.permute.xlu0 %270
        %vm272 = vcmask 31744
        %v273 = vsel %vm272, %v267, %v269
        %vm275 = vcmask 97280
        %v277 = vsel %vm275, %v257, 0
        %v279 = vsel %vm254, %v271, 0
        %281 = vmatpush.msra.mxu0 0.0
        %282 = vmatpush.msra.mxu0 0.0
        %283 = vmatpush.msra.mxu0 0.0
        %284 = vmatpush.msra.mxu0 0.0
        %285 = vmatpush.msra.mxu0 0.0
        %286 = vmatpush.msra.mxu0 0.0
        %287 = vmatpush.msra.mxu0 0.0
        %288 = vmatpush.msra.mxu0 0.0
        %289 = vmatpush.msra.mxu0 0.0
        %290 = vmatpush.msra.mxu0 0.0
        %291 = vmatpush.msra.mxu0 0.0
        %292 = vmatpush.msra.mxu0 0.0
        %293 = vmatpush.msra.mxu0 0.0
        %294 = vmatpush.msra.mxu0 0.0
        %295 = vmatpush.msra.mxu0 %v279
        %296 = vmatpush.msra.mxu0 %v273
        %297 = vmatmul.f32.gmra.mxu0 %v277
        %v298 = vpop.f32.mrf.mxu0
        %v299 = vadd.f32 %v262, %v298
        %300 = vdwg.mxu0
        %vm301 = vcmask 130048
        %302 = vst.msk [vmem:[%s198] sm:$0xff] %vm301, %v299
        %s303 = sand.u32 %s110, 1
        %s304 = scalar_lea.sflag [#allocation6], %s303
        %s305 = sand.u32 %s110, 1
        %s306 = smul.addr %s305, 8
        %s307 = scalar_lea.vmem [#allocation7], %s306
        // Predicated region
        $region41: #{tpu_custom_call.1} parent=31 // pred_check
          %p308 = pneg %p120
        $region42: #{tpu_custom_call.1} parent=31 // pred_check_branch
          %310 = sbr.rel (%p308) target = $region44
        $region43: #{tpu_custom_call.1} parent=31 // pred_region
          %312 = vsyncadd %s304, 0
          %s313 = sadd.s32 %s23, %s22
          %s314 = smul.addr %s313, 8
          %s315 = scalar_lea.hbm %s3, %s314
          %s317 = sshll.u32 %s307, 4
          %s318 = int_to_ptr.vmem [resolvable:$true] %s317
          %s319 = sshll.u32 %s315, 4
          %s320 = int_to_ptr.hbm [resolvable:$true] %s319
          %322 = dma.vmem_to_hbm [thread:$0]  %s318, 128, %s320, %s304
        $region44: #{tpu_custom_call.1} parent=31 // pred_fallthru
          _
      $region32: #{tpu_custom_call.1} parent=5 // pred_fallthru
        _
      %p323 = scmp.le.s32.totalorder 2, %s13
      // Predicated region
      $region45: #{tpu_custom_call.1} parent=5 // pred_check
        %p324 = pneg %p323
      $region46: #{tpu_custom_call.1} parent=5 // pred_check_branch
        %326 = sbr.rel (%p324) target = $region48
      $region47: #{tpu_custom_call.1} parent=5 // pred_region
        %s327 = ssub.s32 %s13, 2
        // Predicated region
        $region49: #{tpu_custom_call.1} parent=47 // pred_check
          %p328 = pneg %p126
        $region50: #{tpu_custom_call.1} parent=47 // pred_check_branch
          %330 = sbr.rel (%p328) target = $region52
        $region51: #{tpu_custom_call.1} parent=47 // pred_region
          %s331 = sand.u32 %s111, 1
          %s332 = scalar_lea.sflag [#allocation6], %s331
          %s333 = sand.u32 %s111, 1
          %s334 = smul.addr %s333, 8
          %s335 = scalar_lea.vmem [#allocation7], %s334
          %337 = dma.done %s332, 128
        $region52: #{tpu_custom_call.1} parent=47 // pred_fallthru
          _
      $region48: #{tpu_custom_call.1} parent=5 // pred_fallthru
        _
    $region6: #{tpu_custom_call.1} parent=1 // loop_footer
      %s17 = sadd.s32 1, %s13
    $region7: #{tpu_custom_call.1} parent=1 // loop_footer_branch
      %12 = sbr.rel target = $region3
    $region8: #{tpu_custom_call.1} parent=1 // loop_exit
      _
    %338 = vsyncpa [#allocation5], 1
    %s339 = scalar_lea.sflag [#allocation5], 1
    %340 = vsyncpa %s339, 1
    %341 = vsyncpa [#allocation6], 1
    %s342 = scalar_lea.sflag [#allocation6], 1
    %343 = vsyncpa %s342, 1

</llo_original>
